<compile_context>
chip_gen: v6e
topology: v6e:2x2x1
jax: 0.10.0
libtpu: 0.0.40
codegen_flags: <defaults>
</compile_context>

<pallas_src>
import jax
import jax.numpy as jnp
from jax.experimental import pallas as pl
from jax.experimental.pallas import tpu as pltpu


def _dataterm_kernel(lam_ref, x_ref, z_ref, prox_ref, grad_ref, esum_ref):
    # lam_ref: SMEM (1,1); x/z/prox/grad: VMEM (tile_rows, 128);
    # esum_ref: VMEM (8, 128) per-block partial of sum((x-z)^2).
    lam = lam_ref[0, 0]
    inv = 1.0 / (1.0 + lam)          # scalar reciprocal, once per block

    x = x_ref[...].astype(jnp.float32)
    z = z_ref[...].astype(jnp.float32)
    diff = x - z

    grad_ref[...] = (lam * diff).astype(grad_ref.dtype)
    prox_ref[...] = ((x + lam * z) * inv).astype(prox_ref.dtype)

    # Per-block energy partial: fold sublane groups of 8 with plain vreg adds
    # (tile-aligned reshape, no cross-lane reduce in the hot loop).
    d2 = diff * diff
    tr, lanes = d2.shape
    esum_ref[...] = jnp.sum(d2.reshape(tr // 8, 8, lanes), axis=0)


def dataterm_ops(x, z, lam, *, tile_rows=2048, lanes=128):
    """Returns (prox(x), grad(x), energy(x)) for the L2 dataterm vs. data z."""
    orig_shape = x.shape
    orig_dtype = x.dtype
    n = x.size

    # Static (Python-int) tiling math.
    rows_raw = -(-n // lanes)                       # ceil(n / lanes)
    tr = max(8, min(tile_rows, ((rows_raw + 7) // 8) * 8))
    tr = ((tr + 7) // 8) * 8                        # multiple of 8 sublanes
    rows = ((rows_raw + tr - 1) // tr) * tr         # whole number of blocks
    n_pad = rows * lanes
    num_blocks = rows // tr

    xf = x.reshape(-1)
    zf = z.reshape(-1)
    if n_pad != n:
        # Zero-pad: padded region has x==z==0 -> grad=0, prox=0, energy+=0.
        xf = jnp.pad(xf, (0, n_pad - n))
        zf = jnp.pad(zf, (0, n_pad - n))
    x2 = xf.reshape(rows, lanes)
    z2 = zf.reshape(rows, lanes)

    lam_arr = jnp.full((1, 1), lam, dtype=jnp.float32)

    itemsize = x2.dtype.itemsize
    cost = pl.CostEstimate(
        flops=7 * n_pad,
        transcendentals=0,
        bytes_accessed=4 * n_pad * itemsize + num_blocks * 8 * lanes * 4,
    )

    prox2, grad2, partials = pl.pallas_call(
        _dataterm_kernel,
        out_shape=(
            jax.ShapeDtypeStruct((rows, lanes), orig_dtype),
            jax.ShapeDtypeStruct((rows, lanes), orig_dtype),
            jax.ShapeDtypeStruct((num_blocks * 8, lanes), jnp.float32),
        ),
        grid=(num_blocks,),
        in_specs=[
            pl.BlockSpec(memory_space=pltpu.SMEM),            # lam (1,1)
            pl.BlockSpec((tr, lanes), lambda i: (i, 0)),      # x
            pl.BlockSpec((tr, lanes), lambda i: (i, 0)),      # z
        ],
        out_specs=[
            pl.BlockSpec((tr, lanes), lambda i: (i, 0)),      # prox
            pl.BlockSpec((tr, lanes), lambda i: (i, 0)),      # grad
            pl.BlockSpec((8, lanes), lambda i: (i, 0)),       # energy partials
        ],
        compiler_params=pltpu.CompilerParams(
            dimension_semantics=("parallel",),
            vmem_limit_bytes=32 * 1024 * 1024,
        ),
        cost_estimate=cost,
    )(lam_arr, x2, z2)

    energy = 0.5 * lam * jnp.sum(partials)          # tiny finish in the wrapper
    prox = prox2.reshape(-1)[:n].reshape(orig_shape)
    grad = grad2.reshape(-1)[:n].reshape(orig_shape)
    return prox, grad, energy


if __name__ == "__main__":
    key = jax.random.PRNGKey(0)
    kx, kz = jax.random.split(key)

    B, C, H, W = 2, 4, 16, 16          # NCHW, as in the PyTorch module
    x = jax.random.normal(kx, (B, C, H, W), dtype=jnp.float32)
    z = jax.random.normal(kz, (B, C, H, W), dtype=jnp.float32)
    lam = 0.5

    prox, grad, energy = dataterm_ops(x, z, lam)
    jax.block_until_ready((prox, grad, energy))

    # Pure-JAX reference check.
    diff = x - z
    ref_grad = lam * diff
    ref_prox = (x + lam * z) / (1.0 + lam)
    ref_energy = 0.5 * lam * jnp.sum(diff * diff)

    assert jnp.allclose(grad, ref_grad, atol=1e-5, rtol=1e-5)
    assert jnp.allclose(prox, ref_prox, atol=1e-5, rtol=1e-5)
    assert jnp.allclose(energy, ref_energy, atol=1e-3, rtol=1e-5)

    print("KERNEL_OK")
</pallas_src>

<mosaic_0001>
module attributes {stable_mosaic.version = 11 : i64} {
  func.func @_dataterm_kernel(%arg0: i32, %arg1: memref<1x1xf32, #tpu.memory_space<smem>>, %arg2: memref<16x128xf32, #tpu.memory_space<vmem>>, %arg3: memref<16x128xf32, #tpu.memory_space<vmem>>, %arg4: memref<16x128xf32, #tpu.memory_space<vmem>>, %arg5: memref<16x128xf32, #tpu.memory_space<vmem>>, %arg6: memref<8x128xf32, #tpu.memory_space<vmem>>) attributes {dimension_semantics = [#tpu.dimension_semantics<parallel>], iteration_bounds = array<i64: 1>, scalar_prefetch = 0 : i64, scratch_operands = 0 : i64, tpu.core_type = #tpu.core_type<tc>, window_params = [{transform_indices = @transform_0, window_bounds = array<i64: 1, 1>}, {transform_indices = @transform_1, window_bounds = array<i64: 16, 128>}, {transform_indices = @transform_2, window_bounds = array<i64: 16, 128>}, {transform_indices = @transform_3, window_bounds = array<i64: 16, 128>}, {transform_indices = @transform_4, window_bounds = array<i64: 16, 128>}, {transform_indices = @transform_5, window_bounds = array<i64: 8, 128>}]} {
    %c0 = arith.constant 0 : index
    %c0_0 = arith.constant 0 : index
    %0 = memref.load %arg1[%c0, %c0_0] : memref<1x1xf32, #tpu.memory_space<smem>>
    %cst = arith.constant 1.000000e+00 : f32
    %1 = arith.addf %cst, %0 : f32
    %cst_1 = arith.constant 1.000000e+00 : f32
    %2 = arith.divf %cst_1, %1 : f32
    %c0_2 = arith.constant 0 : index
    %c0_3 = arith.constant 0 : index
    %3 = vector.load %arg2[%c0_2, %c0_3] : memref<16x128xf32, #tpu.memory_space<vmem>>, vector<16x128xf32>
    %c0_4 = arith.constant 0 : index
    %c0_5 = arith.constant 0 : index
    %4 = vector.load %arg3[%c0_4, %c0_5] : memref<16x128xf32, #tpu.memory_space<vmem>>, vector<16x128xf32>
    %5 = arith.subf %3, %4 : vector<16x128xf32>
    %6 = vector.broadcast %0 : f32 to vector<16x128xf32>
    %7 = arith.mulf %6, %5 : vector<16x128xf32>
    %c0_6 = arith.constant 0 : index
    %c0_7 = arith.constant 0 : index
    %8 = vector.load %arg5[%c0_6, %c0_7] : memref<16x128xf32, #tpu.memory_space<vmem>>, vector<16x128xf32>
    tpu.vector_store %arg5[%c0_6, %c0_7], %7 {strides = array<i32>} : memref<16x128xf32, #tpu.memory_space<vmem>>, vector<16x128xf32>,
    %9 = vector.broadcast %0 : f32 to vector<16x128xf32>
    %10 = arith.mulf %9, %4 : vector<16x128xf32>
    %11 = arith.addf %3, %10 : vector<16x128xf32>
    %12 = vector.broadcast %2 : f32 to vector<16x128xf32>
    %13 = arith.mulf %11, %12 : vector<16x128xf32>
    %c0_8 = arith.constant 0 : index
    %c0_9 = arith.constant 0 : index
    %14 = vector.load %arg4[%c0_8, %c0_9] : memref<16x128xf32, #tpu.memory_space<vmem>>, vector<16x128xf32>
    tpu.vector_store %arg4[%c0_8, %c0_9], %13 {strides = array<i32>} : memref<16x128xf32, #tpu.memory_space<vmem>>, vector<16x128xf32>,
    %15 = arith.mulf %5, %5 : vector<16x128xf32>
    %16 = vector.shape_cast %15 : vector<16x128xf32> to vector<2x8x128xf32>
    %cst_10 = arith.constant dense<0.000000e+00> : vector<8x128xf32>
    %17 = vector.multi_reduction <add>, %16, %cst_10 [0] : vector<2x8x128xf32> to vector<8x128xf32>
    %c0_11 = arith.constant 0 : index
    %c0_12 = arith.constant 0 : index
    %18 = vector.load %arg6[%c0_11, %c0_12] : memref<8x128xf32, #tpu.memory_space<vmem>>, vector<8x128xf32>
    tpu.vector_store %arg6[%c0_11, %c0_12], %17 {strides = array<i32>} : memref<8x128xf32, #tpu.memory_space<vmem>>, vector<8x128xf32>,
    return
  }
  func.func @transform_0(%arg0: i32) -> (i32, i32) {
    %c0_i32 = arith.constant 0 : i32
    %c0_i32_0 = arith.constant 0 : i32
    %c0_i32_1 = arith.constant 0 : i32
    return %c0_i32, %c0_i32_0 : i32, i32
  }
  func.func @transform_1(%arg0: i32) -> (i32, i32) {
    %c0_i32 = arith.constant 0 : i32
    %c0_i32_0 = arith.constant 0 : i32
    return %arg0, %c0_i32 : i32, i32
  }
  func.func @transform_2(%arg0: i32) -> (i32, i32) {
    %c0_i32 = arith.constant 0 : i32
    %c0_i32_0 = arith.constant 0 : i32
    return %arg0, %c0_i32 : i32, i32
  }
  func.func @transform_3(%arg0: i32) -> (i32, i32) {
    %c0_i32 = arith.constant 0 : i32
    %c0_i32_0 = arith.constant 0 : i32
    return %arg0, %c0_i32 : i32, i32
  }
  func.func @transform_4(%arg0: i32) -> (i32, i32) {
    %c0_i32 = arith.constant 0 : i32
    %c0_i32_0 = arith.constant 0 : i32
    return %arg0, %c0_i32 : i32, i32
  }
  func.func @transform_5(%arg0: i32) -> (i32, i32) {
    %c0_i32 = arith.constant 0 : i32
    %c0_i32_0 = arith.constant 0 : i32
    return %arg0, %c0_i32 : i32, i32
  }
}

</mosaic_0001>

<llo_original>
// kernel: tpu_custom_call.1
$region0: #{tpu_custom_call.1}
  #allocation0 [shape = 'u32[]', space=smem, size = 0x4, offset = 0x4, fixed_abs, tag = 'smem constant byte address 0x4 - core index']
  #allocation1 [shape = 'u32[144,128]{1,0:T(1,128)}', space=vmem, size = 0x12000, scoped, tag = 'internal scratch']
  #allocation2 [shape = 'f32[1,1]{1,0:T(1,128)S(6)}', space=smem, size = 0x200, scoped, tag = 'scoped memory for tpu_custom_call.1']
  %s0 = inlined_call_operand.<no memory space> [shape: f32[1,1], index: 0, kind: input, shape index: {}]
  %s1 = inlined_call_operand.hbm [shape: f32[16,128], index: 1, kind: input, shape index: {}]
  %s2 = inlined_call_operand.hbm [shape: f32[16,128], index: 2, kind: input, shape index: {}]
  %s3 = inlined_call_operand.hbm [shape: f32[16,128], index: 3, kind: output, shape index: {0}]
  %s4 = inlined_call_operand.hbm [shape: f32[16,128], index: 4, kind: output, shape index: {1}]
  %s5 = inlined_call_operand.hbm [shape: f32[8,128], index: 5, kind: output, shape index: {2}]
  %6 = xla_tuple %s3, %s4, %s5
  %s7 = sld [smem:[#allocation0]]
  $region46: #{tpu_custom_call.1} parent=0
    _
  %s9 = ssub.s32 1, %s7
  %s10 = scalar_select 0, %s9, %s7
  %11 = sst [smem:[#allocation2]] %s0
  $region1: #{tpu_custom_call.1} parent=0
    #allocation3 [shape = 'u8[8192]{0}', space=vmem, size = 0x2000, scoped, tag = 'input window, operand 1, single buffered']
    #allocation4 [shape = 's32[1]{0}', space=sflag, size = 0x4, scoped, tag = 'scoped memory for tpu_custom_call.1']
    #allocation5 [shape = 's32[1]{0}', space=sflag, size = 0x4, scoped, tag = 'scoped memory for tpu_custom_call.1']
    #allocation6 [shape = 'u8[8192]{0}', space=vmem, size = 0x2000, scoped, tag = 'input window, operand 2, single buffered']
    #allocation7 [shape = 's32[1]{0}', space=sflag, size = 0x4, scoped, tag = 'scoped memory for tpu_custom_call.1']
    #allocation8 [shape = 'u8[8192]{0}', space=vmem, size = 0x2000, scoped, tag = 'output window, operand 0, single buffered']
    #allocation9 [shape = 'u8[8192]{0}', space=vmem, size = 0x2000, scoped, tag = 'output window, operand 1, single buffered']
    #allocation10 [shape = 's32[1]{0}', space=sflag, size = 0x4, scoped, tag = 'scoped memory for tpu_custom_call.1']
    #allocation11 [shape = 'u8[4096]{0}', space=vmem, size = 0x1000, scoped, tag = 'output window, operand 2, single buffered']
    %12 = vsyncpa [#allocation4], 0
    %13 = vsyncpa [#allocation7], 0
    %14 = vsyncpa [#allocation5], 0
    %15 = vsyncpa [#allocation10], 0
    // Predicated region
    $region2: #{tpu_custom_call.1} parent=1 // pred_check
      _
    $region3: #{tpu_custom_call.1} parent=1 // pred_check_branch
      %17 = sbr.rel (0) target = $region5
    $region4: #{tpu_custom_call.1} parent=1 // pred_region
      _
    $region5: #{tpu_custom_call.1} parent=1 // pred_fallthru
      _
    // Predicated region
    $region6: #{tpu_custom_call.1} parent=1 // pred_check
      _
    $region7: #{tpu_custom_call.1} parent=1 // pred_check_branch
      %19 = sbr.rel (0) target = $region9
    $region8: #{tpu_custom_call.1} parent=1 // pred_region
      %s21 = ssub.s32 256, 256
      %22 = vsyncadd [#allocation4], %s21
      %s23 = sshll.u32 [#allocation3], 4
      %s24 = int_to_ptr.vmem [resolvable:$true] %s23
      %29 = dma.hbm_to_vmem [thread:$0]  %s1, 256, %s24, [#allocation4], 128, 128, 8
    $region9: #{tpu_custom_call.1} parent=1 // pred_fallthru
      _
    // Predicated region
    $region10: #{tpu_custom_call.1} parent=1 // pred_check
      _
    $region11: #{tpu_custom_call.1} parent=1 // pred_check_branch
      %31 = sbr.rel (0) target = $region13
    $region12: #{tpu_custom_call.1} parent=1 // pred_region
      %s33 = ssub.s32 256, 256
      %34 = vsyncadd [#allocation7], %s33
      %s35 = sshll.u32 [#allocation6], 4
      %s36 = int_to_ptr.vmem [resolvable:$true] %s35
      %41 = dma.hbm_to_vmem [thread:$0]  %s2, 256, %s36, [#allocation7], 128, 128, 8
    $region13: #{tpu_custom_call.1} parent=1 // pred_fallthru
      _
    // Predicated region
    $region14: #{tpu_custom_call.1} parent=1 // pred_check
      _
    $region15: #{tpu_custom_call.1} parent=1 // pred_check_branch
      %43 = sbr.rel (0) target = $region17
    $region16: #{tpu_custom_call.1} parent=1 // pred_region
      %44 = dma.done [#allocation4], 256
    $region17: #{tpu_custom_call.1} parent=1 // pred_fallthru
      _
    // Predicated region
    $region18: #{tpu_custom_call.1} parent=1 // pred_check
      _
    $region19: #{tpu_custom_call.1} parent=1 // pred_check_branch
      %46 = sbr.rel (0) target = $region21
    $region20: #{tpu_custom_call.1} parent=1 // pred_region
      %47 = dma.done [#allocation7], 256
    $region21: #{tpu_custom_call.1} parent=1 // pred_fallthru
      _
    %s48 = sld [smem:[#allocation2]]
    %s49 = sadd.f32 %s48, 1.0
    %v50 = vstv %s49
    %v51 = vrcp.pop %v50
    %s52 = vtos %v51
    %v53 = vld [vmem:[#allocation3] sm:$0xff]
    %v54 = vld [vmem:[#allocation3 + $0x8] sm:$0xff]
    %v55 = vld [vmem:[#allocation6] sm:$0xff]
    %v56 = vld [vmem:[#allocation6 + $0x8] sm:$0xff]
    %v57 = vsub.f32 %v53, %v55
    %v58 = vsub.f32 %v54, %v56
    %v59 = vstv %s48
    %v60 = vmul.f32 %v59, %v57
    %v61 = vmul.f32 %v59, %v58
    %62 = vst [vmem:[#allocation9] sm:$0xff] %v60
    %63 = vst [vmem:[#allocation9 + $0x8] sm:$0xff] %v61
    %v64 = vmul.f32 %v59, %v55
    %v65 = vmul.f32 %v59, %v56
    %v66 = vadd.f32 %v53, %v64
    %v67 = vadd.f32 %v54, %v65
    %v68 = vstv %s52
    %v69 = vmul.f32 %v66, %v68
    %v70 = vmul.f32 %v67, %v68
    %71 = vst [vmem:[#allocation8] sm:$0xff] %v69
    %72 = vst [vmem:[#allocation8 + $0x8] sm:$0xff] %v70
    %v73 = vmul.f32 %v57, %v57
    %v74 = vmul.f32 %v58, %v58
    %v75 = vadd.f32 %v73, %v74
    %76 = vst [vmem:[#allocation11] sm:$0xff] %v75
    // Predicated region
    $region22: #{tpu_custom_call.1} parent=1 // pred_check
      _
    $region23: #{tpu_custom_call.1} parent=1 // pred_check_branch
      %78 = sbr.rel (0) target = $region25
    $region24: #{tpu_custom_call.1} parent=1 // pred_region
      %s80 = ssub.s32 256, 256
      %81 = vsyncadd [#allocation5], %s80
      %s82 = sshll.u32 [#allocation8], 4
      %s83 = int_to_ptr.vmem [resolvable:$true] %s82
      %88 = dma.vmem_to_hbm [thread:$0]  %s83, 256, %s3, [#allocation5], 128, 128, 8
    $region25: #{tpu_custom_call.1} parent=1 // pred_fallthru
      _
    // Predicated region
    $region26: #{tpu_custom_call.1} parent=1 // pred_check
      _
    $region27: #{tpu_custom_call.1} parent=1 // pred_check_branch
      %90 = sbr.rel (0) target = $region29
    $region28: #{tpu_custom_call.1} parent=1 // pred_region
      %s92 = ssub.s32 256, 256
      %93 = vsyncadd [#allocation10], %s92
      %s94 = sshll.u32 [#allocation9], 4
      %s95 = int_to_ptr.vmem [resolvable:$true] %s94
      %100 = dma.vmem_to_hbm [thread:$0]  %s95, 256, %s4, [#allocation10], 128, 128, 8
    $region29: #{tpu_custom_call.1} parent=1 // pred_fallthru
      _
    // Predicated region
    $region30: #{tpu_custom_call.1} parent=1 // pred_check
      _
    $region31: #{tpu_custom_call.1} parent=1 // pred_check_branch
      %102 = sbr.rel (0) target = $region33
    $region32: #{tpu_custom_call.1} parent=1 // pred_region
      %s104 = ssub.s32 128, 128
      %105 = vsyncadd [#allocation10], %s104
      %s107 = sshll.u32 [#allocation11], 4
      %s108 = int_to_ptr.vmem [resolvable:$true] %s107
      %110 = dma.vmem_to_hbm [thread:$0]  %s108, 128, %s5, [#allocation10]
    $region33: #{tpu_custom_call.1} parent=1 // pred_fallthru
      _
    // Predicated region
    $region34: #{tpu_custom_call.1} parent=1 // pred_check
      _
    $region35: #{tpu_custom_call.1} parent=1 // pred_check_branch
      %112 = sbr.rel (0) target = $region37
    $region36: #{tpu_custom_call.1} parent=1 // pred_region
      %113 = dma.done [#allocation5], 256
    $region37: #{tpu_custom_call.1} parent=1 // pred_fallthru
      _
    // Predicated region
    $region38: #{tpu_custom_call.1} parent=1 // pred_check
      _
    $region39: #{tpu_custom_call.1} parent=1 // pred_check_branch
      %115 = sbr.rel (0) target = $region41
    $region40: #{tpu_custom_call.1} parent=1 // pred_region
      %116 = dma.done [#allocation10], 256
    $region41: #{tpu_custom_call.1} parent=1 // pred_fallthru
      _
    // Predicated region
    $region42: #{tpu_custom_call.1} parent=1 // pred_check
      _
    $region43: #{tpu_custom_call.1} parent=1 // pred_check_branch
      %118 = sbr.rel (0) target = $region45
    $region44: #{tpu_custom_call.1} parent=1 // pred_region
      %119 = dma.done [#allocation10], 128
    $region45: #{tpu_custom_call.1} parent=1 // pred_fallthru
      _
    %120 = vsyncpa [#allocation4], 1
    %121 = vsyncpa [#allocation7], 1
    %122 = vsyncpa [#allocation5], 1
    %123 = vsyncpa [#allocation10], 1

</llo_original>
